<compile_context>
chip_gen: v7x
topology: tpu7x:2x2x1
jax: 0.10.0
libtpu: 0.0.40
codegen_flags: <defaults>
</compile_context>

<pallas_src>
import functools

import jax
import jax.numpy as jnp
from jax.experimental import pallas as pl
from jax.experimental.pallas import tpu as pltpu


def _make_resblock_kernel(H, W, C, L, mxu_dtype):
    """Kernel for fixed image size, channel count and per-step lane count L."""

    def kernel(x_ref, w1_ref, b1_ref, w2_ref, b2_ref, mask_ref, out_ref,
               patch_ref):
        # x_ref    : (C, L)  f32        channel rows; (batch, spatial) on lanes
        # w*_ref   : (C, 9C) mxu_dtype  im2col conv weights (t-major, ci-minor)
        # b*_ref   : (C, 1)  f32        per-channel biases
        # mask_ref : (9, C, L) f32      per-tap source-validity masks
        # out_ref  : (C, L)
        # patch_ref: (9C, L) mxu_dtype  im2col patch scratch

        x = x_ref[...].astype(jnp.float32)

        def conv(act, w_ref, b_ref):
            # Build the im2col patch with XLU rolls of the in-register
            # activation along the lane axis.  Masks (pre-broadcast, applied in
            # f32 before any MXU-dtype cast) zero every position whose source
            # pixel falls outside its own image, which also kills the circular
            # wrap of roll across row / image / batch boundaries.
            for t in range(9):
                ky, kx = divmod(t, 3)
                s = (ky - 1) * W + (kx - 1)          # lane shift for this tap
                if s == 0:
                    tap = act                         # center: no roll, mask==1
                else:
                    tap = pltpu.roll(act, shift=(-s) % L, axis=1) * mask_ref[t]
                patch_ref[t * C:(t + 1) * C, :] = tap.astype(patch_ref.dtype)
            # One MXU matmul per conv: (C, 9C) @ (9C, L), f32 accumulation.
            return jnp.dot(w_ref[...], patch_ref[...],
                           preferred_element_type=jnp.float32) + b_ref[...]

        h1 = conv(jnp.maximum(x, 0.0), w1_ref, b1_ref)     # ReLU -> conv1 + b1
        h2 = conv(jnp.maximum(h1, 0.0), w2_ref, b2_ref)    # ReLU -> conv2 + b2
        out_ref[...] = (h2 + x).astype(out_ref.dtype)      # residual skip (f32)

    return kernel


def _im2col_weight(w_oihw):
    """OIHW (C, C, 3, 3) -> (C, 9C) with [co, t*C + ci] = w[co, ci, ky, kx]."""
    C = w_oihw.shape[0]
    return jnp.transpose(w_oihw, (0, 2, 3, 1)).reshape(C, 9 * C)


def _tap_masks(H, W, C, L):
    """(9, C, L) f32 masks: 1 where the tap's source pixel is inside its image.

    L = (batches per grid step) * H * W; the mask depends only on the position
    within an image, so one mask block serves every grid step / batch.
    """
    HW = H * W
    pos = jnp.arange(L) % HW
    row, col = pos // W, pos % W
    rows = []
    for t in range(9):
        ky, kx = divmod(t, 3)
        dy, dx = ky - 1, kx - 1
        ok = ((row + dy >= 0) & (row + dy < H)
              & (col + dx >= 0) & (col + dx < W))
        rows.append(ok.astype(jnp.float32))
    m = jnp.stack(rows)                                   # (9, L)
    return jnp.broadcast_to(m[:, None, :], (9, C, L))     # pre-broadcast


@functools.partial(jax.jit, static_argnames=("mxu_dtype",))
def residual_block(x_nchw, w1_oihw, b1, w2_oihw, b2, *, mxu_dtype=jnp.float32):
    """Pallas implementation of ResidualBlock.forward. x_nchw: (N, C, H, W)."""
    N, C, H, W = x_nchw.shape
    HW = H * W

    # Batch-parallel grid only when per-step work dominates the ~0.35us/step
    # overhead (feeds both v7x TensorCores; harmless no-op choice on v5e/v6e).
    G = N if (N > 1 and C * HW >= 64 * 1024 and (HW % 128) == 0) else 1
    L = (N // G) * HW                                     # lanes per grid step

    # Layout plumbing only (no compute): channels -> sublanes, batch*spatial ->
    # lanes.  Loads/stores are lane-dense and batch stays off the contraction.
    x2d = jnp.transpose(x_nchw, (1, 0, 2, 3)).reshape(C, N * HW)

    w1_mat = _im2col_weight(w1_oihw).astype(mxu_dtype)    # (C, 9C)
    w2_mat = _im2col_weight(w2_oihw).astype(mxu_dtype)
    b1_col = b1.reshape(C, 1).astype(jnp.float32)
    b2_col = b2.reshape(C, 1).astype(jnp.float32)
    masks = _tap_masks(H, W, C, L)                        # (9, C, L)

    kernel = _make_resblock_kernel(H, W, C, L, mxu_dtype)

    flops = 2 * (2 * C * 9 * C * N * HW)                  # two im2col matmuls
    bytes_accessed = 4 * (2 * x2d.size + masks.size) + \
        jnp.dtype(mxu_dtype).itemsize * (w1_mat.size + w2_mat.size)

    out2d = pl.pallas_call(
        kernel,
        out_shape=jax.ShapeDtypeStruct((C, N * HW), x_nchw.dtype),
        grid=(G,),
        in_specs=[
            pl.BlockSpec((C, L), lambda i: (0, i)),
            pl.BlockSpec((C, 9 * C), lambda i: (0, 0)),
            pl.BlockSpec((C, 1), lambda i: (0, 0)),
            pl.BlockSpec((C, 9 * C), lambda i: (0, 0)),
            pl.BlockSpec((C, 1), lambda i: (0, 0)),
            pl.BlockSpec((9, C, L), lambda i: (0, 0, 0)),
        ],
        out_specs=pl.BlockSpec((C, L), lambda i: (0, i)),
        scratch_shapes=[
            pltpu.VMEM((9 * C, L), mxu_dtype),            # im2col patch
        ],
        compiler_params=pltpu.CompilerParams(
            dimension_semantics=("parallel",)),
        cost_estimate=pl.CostEstimate(flops=flops, transcendentals=0,
                                      bytes_accessed=int(bytes_accessed)),
    )(x2d, w1_mat, b1_col, w2_mat, b2_col, masks)

    return out2d.reshape(C, N, H, W).transpose(1, 0, 2, 3)


def _reference(x, w1, b1, w2, b2):
    """Pure-JAX reference matching PyTorch semantics exactly (NCHW / OIHW)."""
    dn = jax.lax.conv_dimension_numbers(x.shape, w1.shape, ("NCHW", "OIHW", "NCHW"))
    h = jax.nn.relu(x)
    h = jax.lax.conv_general_dilated(h, w1, (1, 1), ((1, 1), (1, 1)),
                                     dimension_numbers=dn)
    h = h + b1[None, :, None, None]
    h = jax.nn.relu(h)
    h = jax.lax.conv_general_dilated(h, w2, (1, 1), ((1, 1), (1, 1)),
                                     dimension_numbers=dn)
    h = h + b2[None, :, None, None]
    return h + x


if __name__ == "__main__":
    # Small, deterministic setup consistent with ResidualBlock(channels=4)
    N, C, H, W = 2, 4, 16, 16
    key = jax.random.PRNGKey(0)
    k_x, k_w1, k_b1, k_w2, k_b2 = jax.random.split(key, 5)

    x = jax.random.normal(k_x, (N, C, H, W), jnp.float32)
    w1 = jax.random.normal(k_w1, (C, C, 3, 3), jnp.float32) * 0.1   # OIHW
    b1 = jax.random.normal(k_b1, (C,), jnp.float32) * 0.1
    w2 = jax.random.normal(k_w2, (C, C, 3, 3), jnp.float32) * 0.1   # OIHW
    b2 = jax.random.normal(k_b2, (C,), jnp.float32) * 0.1

    out = jax.block_until_ready(residual_block(x, w1, b1, w2, b2))
    ref = jax.block_until_ready(_reference(x, w1, b1, w2, b2))

    assert out.shape == (N, C, H, W)
    assert jnp.allclose(out, ref, atol=1e-3, rtol=1e-3), "mismatch vs reference"

    print("KERNEL_OK")
</pallas_src>

<mosaic_0001>
module attributes {stable_mosaic.version = 11 : i64} {
  func.func @kernel(%arg0: i32, %arg1: memref<4x512xf32, #tpu.memory_space<vmem>>, %arg2: memref<4x36xf32, #tpu.memory_space<vmem>>, %arg3: memref<4x1xf32, #tpu.memory_space<vmem>>, %arg4: memref<4x36xf32, #tpu.memory_space<vmem>>, %arg5: memref<4x1xf32, #tpu.memory_space<vmem>>, %arg6: memref<9x4x512xf32, #tpu.memory_space<vmem>>, %arg7: memref<4x512xf32, #tpu.memory_space<vmem>>, %arg8: memref<36x512xf32, #tpu.memory_space<vmem>>) attributes {dimension_semantics = [#tpu.dimension_semantics<parallel>], iteration_bounds = array<i64: 1>, scalar_prefetch = 0 : i64, scratch_operands = 1 : i64, tpu.core_type = #tpu.core_type<tc>, window_params = [{transform_indices = @transform_0, window_bounds = array<i64: 4, 512>}, {pipeline_mode = #tpu.pipeline_mode<synchronous>, transform_indices = @transform_1, window_bounds = array<i64: 4, 36>}, {pipeline_mode = #tpu.pipeline_mode<synchronous>, transform_indices = @transform_2, window_bounds = array<i64: 4, 1>}, {pipeline_mode = #tpu.pipeline_mode<synchronous>, transform_indices = @transform_3, window_bounds = array<i64: 4, 36>}, {pipeline_mode = #tpu.pipeline_mode<synchronous>, transform_indices = @transform_4, window_bounds = array<i64: 4, 1>}, {pipeline_mode = #tpu.pipeline_mode<synchronous>, transform_indices = @transform_5, window_bounds = array<i64: 9, 4, 512>}, {transform_indices = @transform_6, window_bounds = array<i64: 4, 512>}]} {
    %c0 = arith.constant 0 : index
    %c0_0 = arith.constant 0 : index
    %0 = vector.load %arg1[%c0, %c0_0] : memref<4x512xf32, #tpu.memory_space<vmem>>, vector<4x512xf32>
    %cst = arith.constant 0.000000e+00 : f32
    %1 = vector.broadcast %cst : f32 to vector<4x512xf32>
    %2 = arith.maximumf %0, %1 : vector<4x512xf32>
    %c17_i32 = arith.constant 17 : i32
    %3 = tpu.dynamic_rotate %2 by %c17_i32 dim 1 : vector<4x512xf32>, i32 -> vector<4x512xf32>
    %c0_1 = arith.constant 0 : index
    %c0_2 = arith.constant 0 : index
    %c0_3 = arith.constant 0 : index
    %4 = vector.load %arg6[%c0_1, %c0_2, %c0_3] : memref<9x4x512xf32, #tpu.memory_space<vmem>>, vector<1x4x512xf32>
    %5 = vector.shape_cast %4 : vector<1x4x512xf32> to vector<4x512xf32>
    %6 = arith.mulf %3, %5 : vector<4x512xf32>
    %c0_4 = arith.constant 0 : index
    %c0_5 = arith.constant 0 : index
    %7 = vector.load %arg8[%c0_4, %c0_5] : memref<36x512xf32, #tpu.memory_space<vmem>>, vector<4x512xf32>
    tpu.vector_store %arg8[%c0_4, %c0_5], %6 {strides = array<i32>} : memref<36x512xf32, #tpu.memory_space<vmem>>, vector<4x512xf32>,
    %c16_i32 = arith.constant 16 : i32
    %8 = tpu.dynamic_rotate %2 by %c16_i32 dim 1 : vector<4x512xf32>, i32 -> vector<4x512xf32>
    %c1 = arith.constant 1 : index
    %c0_6 = arith.constant 0 : index
    %c0_7 = arith.constant 0 : index
    %9 = vector.load %arg6[%c1, %c0_6, %c0_7] : memref<9x4x512xf32, #tpu.memory_space<vmem>>, vector<1x4x512xf32>
    %10 = vector.shape_cast %9 : vector<1x4x512xf32> to vector<4x512xf32>
    %11 = arith.mulf %8, %10 : vector<4x512xf32>
    %c4 = arith.constant 4 : index
    %c0_8 = arith.constant 0 : index
    %12 = vector.load %arg8[%c4, %c0_8] : memref<36x512xf32, #tpu.memory_space<vmem>>, vector<4x512xf32>
    tpu.vector_store %arg8[%c4, %c0_8], %11 {strides = array<i32>} : memref<36x512xf32, #tpu.memory_space<vmem>>, vector<4x512xf32>,
    %c15_i32 = arith.constant 15 : i32
    %13 = tpu.dynamic_rotate %2 by %c15_i32 dim 1 : vector<4x512xf32>, i32 -> vector<4x512xf32>
    %c2 = arith.constant 2 : index
    %c0_9 = arith.constant 0 : index
    %c0_10 = arith.constant 0 : index
    %14 = vector.load %arg6[%c2, %c0_9, %c0_10] : memref<9x4x512xf32, #tpu.memory_space<vmem>>, vector<1x4x512xf32>
    %15 = vector.shape_cast %14 : vector<1x4x512xf32> to vector<4x512xf32>
    %16 = arith.mulf %13, %15 : vector<4x512xf32>
    %c8 = arith.constant 8 : index
    %c0_11 = arith.constant 0 : index
    %17 = vector.load %arg8[%c8, %c0_11] : memref<36x512xf32, #tpu.memory_space<vmem>>, vector<4x512xf32>
    tpu.vector_store %arg8[%c8, %c0_11], %16 {strides = array<i32>} : memref<36x512xf32, #tpu.memory_space<vmem>>, vector<4x512xf32>,
    %c1_i32 = arith.constant 1 : i32
    %18 = tpu.dynamic_rotate %2 by %c1_i32 dim 1 : vector<4x512xf32>, i32 -> vector<4x512xf32>
    %c3 = arith.constant 3 : index
    %c0_12 = arith.constant 0 : index
    %c0_13 = arith.constant 0 : index
    %19 = vector.load %arg6[%c3, %c0_12, %c0_13] : memref<9x4x512xf32, #tpu.memory_space<vmem>>, vector<1x4x512xf32>
    %20 = vector.shape_cast %19 : vector<1x4x512xf32> to vector<4x512xf32>
    %21 = arith.mulf %18, %20 : vector<4x512xf32>
    %c12 = arith.constant 12 : index
    %c0_14 = arith.constant 0 : index
    %22 = vector.load %arg8[%c12, %c0_14] : memref<36x512xf32, #tpu.memory_space<vmem>>, vector<4x512xf32>
    tpu.vector_store %arg8[%c12, %c0_14], %21 {strides = array<i32>} : memref<36x512xf32, #tpu.memory_space<vmem>>, vector<4x512xf32>,
    %c16 = arith.constant 16 : index
    %c0_15 = arith.constant 0 : index
    %23 = vector.load %arg8[%c16, %c0_15] : memref<36x512xf32, #tpu.memory_space<vmem>>, vector<4x512xf32>
    tpu.vector_store %arg8[%c16, %c0_15], %2 {strides = array<i32>} : memref<36x512xf32, #tpu.memory_space<vmem>>, vector<4x512xf32>,
    %c511_i32 = arith.constant 511 : i32
    %24 = tpu.dynamic_rotate %2 by %c511_i32 dim 1 : vector<4x512xf32>, i32 -> vector<4x512xf32>
    %c5 = arith.constant 5 : index
    %c0_16 = arith.constant 0 : index
    %c0_17 = arith.constant 0 : index
    %25 = vector.load %arg6[%c5, %c0_16, %c0_17] : memref<9x4x512xf32, #tpu.memory_space<vmem>>, vector<1x4x512xf32>
    %26 = vector.shape_cast %25 : vector<1x4x512xf32> to vector<4x512xf32>
    %27 = arith.mulf %24, %26 : vector<4x512xf32>
    %c20 = arith.constant 20 : index
    %c0_18 = arith.constant 0 : index
    %28 = vector.load %arg8[%c20, %c0_18] : memref<36x512xf32, #tpu.memory_space<vmem>>, vector<4x512xf32>
    tpu.vector_store %arg8[%c20, %c0_18], %27 {strides = array<i32>} : memref<36x512xf32, #tpu.memory_space<vmem>>, vector<4x512xf32>,
    %c497_i32 = arith.constant 497 : i32
    %29 = tpu.dynamic_rotate %2 by %c497_i32 dim 1 : vector<4x512xf32>, i32 -> vector<4x512xf32>
    %c6 = arith.constant 6 : index
    %c0_19 = arith.constant 0 : index
    %c0_20 = arith.constant 0 : index
    %30 = vector.load %arg6[%c6, %c0_19, %c0_20] : memref<9x4x512xf32, #tpu.memory_space<vmem>>, vector<1x4x512xf32>
    %31 = vector.shape_cast %30 : vector<1x4x512xf32> to vector<4x512xf32>
    %32 = arith.mulf %29, %31 : vector<4x512xf32>
    %c24 = arith.constant 24 : index
    %c0_21 = arith.constant 0 : index
    %33 = vector.load %arg8[%c24, %c0_21] : memref<36x512xf32, #tpu.memory_space<vmem>>, vector<4x512xf32>
    tpu.vector_store %arg8[%c24, %c0_21], %32 {strides = array<i32>} : memref<36x512xf32, #tpu.memory_space<vmem>>, vector<4x512xf32>,
    %c496_i32 = arith.constant 496 : i32
    %34 = tpu.dynamic_rotate %2 by %c496_i32 dim 1 : vector<4x512xf32>, i32 -> vector<4x512xf32>
    %c7 = arith.constant 7 : index
    %c0_22 = arith.constant 0 : index
    %c0_23 = arith.constant 0 : index
    %35 = vector.load %arg6[%c7, %c0_22, %c0_23] : memref<9x4x512xf32, #tpu.memory_space<vmem>>, vector<1x4x512xf32>
    %36 = vector.shape_cast %35 : vector<1x4x512xf32> to vector<4x512xf32>
    %37 = arith.mulf %34, %36 : vector<4x512xf32>
    %c28 = arith.constant 28 : index
    %c0_24 = arith.constant 0 : index
    %38 = vector.load %arg8[%c28, %c0_24] : memref<36x512xf32, #tpu.memory_space<vmem>>, vector<4x512xf32>
    tpu.vector_store %arg8[%c28, %c0_24], %37 {strides = array<i32>} : memref<36x512xf32, #tpu.memory_space<vmem>>, vector<4x512xf32>,
    %c495_i32 = arith.constant 495 : i32
    %39 = tpu.dynamic_rotate %2 by %c495_i32 dim 1 : vector<4x512xf32>, i32 -> vector<4x512xf32>
    %c8_25 = arith.constant 8 : index
    %c0_26 = arith.constant 0 : index
    %c0_27 = arith.constant 0 : index
    %40 = vector.load %arg6[%c8_25, %c0_26, %c0_27] : memref<9x4x512xf32, #tpu.memory_space<vmem>>, vector<1x4x512xf32>
    %41 = vector.shape_cast %40 : vector<1x4x512xf32> to vector<4x512xf32>
    %42 = arith.mulf %39, %41 : vector<4x512xf32>
    %c32 = arith.constant 32 : index
    %c0_28 = arith.constant 0 : index
    %43 = vector.load %arg8[%c32, %c0_28] : memref<36x512xf32, #tpu.memory_space<vmem>>, vector<4x512xf32>
    tpu.vector_store %arg8[%c32, %c0_28], %42 {strides = array<i32>} : memref<36x512xf32, #tpu.memory_space<vmem>>, vector<4x512xf32>,
    %c0_29 = arith.constant 0 : index
    %c0_30 = arith.constant 0 : index
    %44 = vector.load %arg2[%c0_29, %c0_30] : memref<4x36xf32, #tpu.memory_space<vmem>>, vector<4x36xf32>
    %c0_31 = arith.constant 0 : index
    %c0_32 = arith.constant 0 : index
    %45 = vector.load %arg8[%c0_31, %c0_32] : memref<36x512xf32, #tpu.memory_space<vmem>>, vector<36x512xf32>
    %cst_33 = arith.constant dense<0.000000e+00> : vector<4x512xf32>
    %46 = tpu.matmul %44, %45, %cst_33 {dimension_numbers = #tpu.dot_dimension_numbers<[1], [0], [0], [1], [0, 0, 1, 1], [], []>} : vector<4x36xf32>, vector<36x512xf32>, vector<4x512xf32> -> vector<4x512xf32>
    %c0_34 = arith.constant 0 : index
    %c0_35 = arith.constant 0 : index
    %47 = vector.load %arg3[%c0_34, %c0_35] : memref<4x1xf32, #tpu.memory_space<vmem>>, vector<4x1xf32>
    %48 = vector.broadcast %47 : vector<4x1xf32> to vector<4x512xf32>
    %49 = arith.addf %46, %48 : vector<4x512xf32>
    %cst_36 = arith.constant 0.000000e+00 : f32
    %50 = vector.broadcast %cst_36 : f32 to vector<4x512xf32>
    %51 = arith.maximumf %49, %50 : vector<4x512xf32>
    %c17_i32_37 = arith.constant 17 : i32
    %52 = tpu.dynamic_rotate %51 by %c17_i32_37 dim 1 : vector<4x512xf32>, i32 -> vector<4x512xf32>
    %c0_38 = arith.constant 0 : index
    %c0_39 = arith.constant 0 : index
    %c0_40 = arith.constant 0 : index
    %53 = vector.load %arg6[%c0_38, %c0_39, %c0_40] : memref<9x4x512xf32, #tpu.memory_space<vmem>>, vector<1x4x512xf32>
    %54 = vector.shape_cast %53 : vector<1x4x512xf32> to vector<4x512xf32>
    %55 = arith.mulf %52, %54 : vector<4x512xf32>
    %c0_41 = arith.constant 0 : index
    %c0_42 = arith.constant 0 : index
    %56 = vector.load %arg8[%c0_41, %c0_42] : memref<36x512xf32, #tpu.memory_space<vmem>>, vector<4x512xf32>
    tpu.vector_store %arg8[%c0_41, %c0_42], %55 {strides = array<i32>} : memref<36x512xf32, #tpu.memory_space<vmem>>, vector<4x512xf32>,
    %c16_i32_43 = arith.constant 16 : i32
    %57 = tpu.dynamic_rotate %51 by %c16_i32_43 dim 1 : vector<4x512xf32>, i32 -> vector<4x512xf32>
    %c1_44 = arith.constant 1 : index
    %c0_45 = arith.constant 0 : index
    %c0_46 = arith.constant 0 : index
    %58 = vector.load %arg6[%c1_44, %c0_45, %c0_46] : memref<9x4x512xf32, #tpu.memory_space<vmem>>, vector<1x4x512xf32>
    %59 = vector.shape_cast %58 : vector<1x4x512xf32> to vector<4x512xf32>
    %60 = arith.mulf %57, %59 : vector<4x512xf32>
    %c4_47 = arith.constant 4 : index
    %c0_48 = arith.constant 0 : index
    %61 = vector.load %arg8[%c4_47, %c0_48] : memref<36x512xf32, #tpu.memory_space<vmem>>, vector<4x512xf32>
    tpu.vector_store %arg8[%c4_47, %c0_48], %60 {strides = array<i32>} : memref<36x512xf32, #tpu.memory_space<vmem>>, vector<4x512xf32>,
    %c15_i32_49 = arith.constant 15 : i32
    %62 = tpu.dynamic_rotate %51 by %c15_i32_49 dim 1 : vector<4x512xf32>, i32 -> vector<4x512xf32>
    %c2_50 = arith.constant 2 : index
    %c0_51 = arith.constant 0 : index
    %c0_52 = arith.constant 0 : index
    %63 = vector.load %arg6[%c2_50, %c0_51, %c0_52] : memref<9x4x512xf32, #tpu.memory_space<vmem>>, vector<1x4x512xf32>
    %64 = vector.shape_cast %63 : vector<1x4x512xf32> to vector<4x512xf32>
    %65 = arith.mulf %62, %64 : vector<4x512xf32>
    %c8_53 = arith.constant 8 : index
    %c0_54 = arith.constant 0 : index
    %66 = vector.load %arg8[%c8_53, %c0_54] : memref<36x512xf32, #tpu.memory_space<vmem>>, vector<4x512xf32>
    tpu.vector_store %arg8[%c8_53, %c0_54], %65 {strides = array<i32>} : memref<36x512xf32, #tpu.memory_space<vmem>>, vector<4x512xf32>,
    %c1_i32_55 = arith.constant 1 : i32
    %67 = tpu.dynamic_rotate %51 by %c1_i32_55 dim 1 : vector<4x512xf32>, i32 -> vector<4x512xf32>
    %c3_56 = arith.constant 3 : index
    %c0_57 = arith.constant 0 : index
    %c0_58 = arith.constant 0 : index
    %68 = vector.load %arg6[%c3_56, %c0_57, %c0_58] : memref<9x4x512xf32, #tpu.memory_space<vmem>>, vector<1x4x512xf32>
    %69 = vector.shape_cast %68 : vector<1x4x512xf32> to vector<4x512xf32>
    %70 = arith.mulf %67, %69 : vector<4x512xf32>
    %c12_59 = arith.constant 12 : index
    %c0_60 = arith.constant 0 : index
    %71 = vector.load %arg8[%c12_59, %c0_60] : memref<36x512xf32, #tpu.memory_space<vmem>>, vector<4x512xf32>
    tpu.vector_store %arg8[%c12_59, %c0_60], %70 {strides = array<i32>} : memref<36x512xf32, #tpu.memory_space<vmem>>, vector<4x512xf32>,
    %c16_61 = arith.constant 16 : index
    %c0_62 = arith.constant 0 : index
    %72 = vector.load %arg8[%c16_61, %c0_62] : memref<36x512xf32, #tpu.memory_space<vmem>>, vector<4x512xf32>
    tpu.vector_store %arg8[%c16_61, %c0_62], %51 {strides = array<i32>} : memref<36x512xf32, #tpu.memory_space<vmem>>, vector<4x512xf32>,
    %c511_i32_63 = arith.constant 511 : i32
    %73 = tpu.dynamic_rotate %51 by %c511_i32_63 dim 1 : vector<4x512xf32>, i32 -> vector<4x512xf32>
    %c5_64 = arith.constant 5 : index
    %c0_65 = arith.constant 0 : index
    %c0_66 = arith.constant 0 : index
    %74 = vector.load %arg6[%c5_64, %c0_65, %c0_66] : memref<9x4x512xf32, #tpu.memory_space<vmem>>, vector<1x4x512xf32>
    %75 = vector.shape_cast %74 : vector<1x4x512xf32> to vector<4x512xf32>
    %76 = arith.mulf %73, %75 : vector<4x512xf32>
    %c20_67 = arith.constant 20 : index
    %c0_68 = arith.constant 0 : index
    %77 = vector.load %arg8[%c20_67, %c0_68] : memref<36x512xf32, #tpu.memory_space<vmem>>, vector<4x512xf32>
    tpu.vector_store %arg8[%c20_67, %c0_68], %76 {strides = array<i32>} : memref<36x512xf32, #tpu.memory_space<vmem>>, vector<4x512xf32>,
    %c497_i32_69 = arith.constant 497 : i32
    %78 = tpu.dynamic_rotate %51 by %c497_i32_69 dim 1 : vector<4x512xf32>, i32 -> vector<4x512xf32>
    %c6_70 = arith.constant 6 : index
    %c0_71 = arith.constant 0 : index
    %c0_72 = arith.constant 0 : index
    %79 = vector.load %arg6[%c6_70, %c0_71, %c0_72] : memref<9x4x512xf32, #tpu.memory_space<vmem>>, vector<1x4x512xf32>
    %80 = vector.shape_cast %79 : vector<1x4x512xf32> to vector<4x512xf32>
    %81 = arith.mulf %78, %80 : vector<4x512xf32>
    %c24_73 = arith.constant 24 : index
    %c0_74 = arith.constant 0 : index
    %82 = vector.load %arg8[%c24_73, %c0_74] : memref<36x512xf32, #tpu.memory_space<vmem>>, vector<4x512xf32>
    tpu.vector_store %arg8[%c24_73, %c0_74], %81 {strides = array<i32>} : memref<36x512xf32, #tpu.memory_space<vmem>>, vector<4x512xf32>,
    %c496_i32_75 = arith.constant 496 : i32
    %83 = tpu.dynamic_rotate %51 by %c496_i32_75 dim 1 : vector<4x512xf32>, i32 -> vector<4x512xf32>
    %c7_76 = arith.constant 7 : index
    %c0_77 = arith.constant 0 : index
    %c0_78 = arith.constant 0 : index
    %84 = vector.load %arg6[%c7_76, %c0_77, %c0_78] : memref<9x4x512xf32, #tpu.memory_space<vmem>>, vector<1x4x512xf32>
    %85 = vector.shape_cast %84 : vector<1x4x512xf32> to vector<4x512xf32>
    %86 = arith.mulf %83, %85 : vector<4x512xf32>
    %c28_79 = arith.constant 28 : index
    %c0_80 = arith.constant 0 : index
    %87 = vector.load %arg8[%c28_79, %c0_80] : memref<36x512xf32, #tpu.memory_space<vmem>>, vector<4x512xf32>
    tpu.vector_store %arg8[%c28_79, %c0_80], %86 {strides = array<i32>} : memref<36x512xf32, #tpu.memory_space<vmem>>, vector<4x512xf32>,
    %c495_i32_81 = arith.constant 495 : i32
    %88 = tpu.dynamic_rotate %51 by %c495_i32_81 dim 1 : vector<4x512xf32>, i32 -> vector<4x512xf32>
    %c8_82 = arith.constant 8 : index
    %c0_83 = arith.constant 0 : index
    %c0_84 = arith.constant 0 : index
    %89 = vector.load %arg6[%c8_82, %c0_83, %c0_84] : memref<9x4x512xf32, #tpu.memory_space<vmem>>, vector<1x4x512xf32>
    %90 = vector.shape_cast %89 : vector<1x4x512xf32> to vector<4x512xf32>
    %91 = arith.mulf %88, %90 : vector<4x512xf32>
    %c32_85 = arith.constant 32 : index
    %c0_86 = arith.constant 0 : index
    %92 = vector.load %arg8[%c32_85, %c0_86] : memref<36x512xf32, #tpu.memory_space<vmem>>, vector<4x512xf32>
    tpu.vector_store %arg8[%c32_85, %c0_86], %91 {strides = array<i32>} : memref<36x512xf32, #tpu.memory_space<vmem>>, vector<4x512xf32>,
    %c0_87 = arith.constant 0 : index
    %c0_88 = arith.constant 0 : index
    %93 = vector.load %arg4[%c0_87, %c0_88] : memref<4x36xf32, #tpu.memory_space<vmem>>, vector<4x36xf32>
    %c0_89 = arith.constant 0 : index
    %c0_90 = arith.constant 0 : index
    %94 = vector.load %arg8[%c0_89, %c0_90] : memref<36x512xf32, #tpu.memory_space<vmem>>, vector<36x512xf32>
    %cst_91 = arith.constant dense<0.000000e+00> : vector<4x512xf32>
    %95 = tpu.matmul %93, %94, %cst_91 {dimension_numbers = #tpu.dot_dimension_numbers<[1], [0], [0], [1], [0, 0, 1, 1], [], []>} : vector<4x36xf32>, vector<36x512xf32>, vector<4x512xf32> -> vector<4x512xf32>
    %c0_92 = arith.constant 0 : index
    %c0_93 = arith.constant 0 : index
    %96 = vector.load %arg5[%c0_92, %c0_93] : memref<4x1xf32, #tpu.memory_space<vmem>>, vector<4x1xf32>
    %97 = vector.broadcast %96 : vector<4x1xf32> to vector<4x512xf32>
    %98 = arith.addf %95, %97 : vector<4x512xf32>
    %99 = arith.addf %98, %0 : vector<4x512xf32>
    %c0_94 = arith.constant 0 : index
    %c0_95 = arith.constant 0 : index
    %100 = vector.load %arg7[%c0_94, %c0_95] : memref<4x512xf32, #tpu.memory_space<vmem>>, vector<4x512xf32>
    tpu.vector_store %arg7[%c0_94, %c0_95], %99 {strides = array<i32>} : memref<4x512xf32, #tpu.memory_space<vmem>>, vector<4x512xf32>,
    return
  }
  func.func @transform_0(%arg0: i32) -> (i32, i32) {
    %c0_i32 = arith.constant 0 : i32
    %c0_i32_0 = arith.constant 0 : i32
    return %c0_i32, %arg0 : i32, i32
  }
  func.func @transform_1(%arg0: i32) -> (i32, i32) {
    %c0_i32 = arith.constant 0 : i32
    %c0_i32_0 = arith.constant 0 : i32
    %c0_i32_1 = arith.constant 0 : i32
    return %c0_i32, %c0_i32_0 : i32, i32
  }
  func.func @transform_2(%arg0: i32) -> (i32, i32) {
    %c0_i32 = arith.constant 0 : i32
    %c0_i32_0 = arith.constant 0 : i32
    %c0_i32_1 = arith.constant 0 : i32
    return %c0_i32, %c0_i32_0 : i32, i32
  }
  func.func @transform_3(%arg0: i32) -> (i32, i32) {
    %c0_i32 = arith.constant 0 : i32
    %c0_i32_0 = arith.constant 0 : i32
    %c0_i32_1 = arith.constant 0 : i32
    return %c0_i32, %c0_i32_0 : i32, i32
  }
  func.func @transform_4(%arg0: i32) -> (i32, i32) {
    %c0_i32 = arith.constant 0 : i32
    %c0_i32_0 = arith.constant 0 : i32
    %c0_i32_1 = arith.constant 0 : i32
    return %c0_i32, %c0_i32_0 : i32, i32
  }
  func.func @transform_5(%arg0: i32) -> (i32, i32, i32) {
    %c0_i32 = arith.constant 0 : i32
    %c0_i32_0 = arith.constant 0 : i32
    %c0_i32_1 = arith.constant 0 : i32
    %c0_i32_2 = arith.constant 0 : i32
    return %c0_i32, %c0_i32_0, %c0_i32_1 : i32, i32, i32
  }
  func.func @transform_6(%arg0: i32) -> (i32, i32) {
    %c0_i32 = arith.constant 0 : i32
    %c0_i32_0 = arith.constant 0 : i32
    return %c0_i32, %arg0 : i32, i32
  }
}

</mosaic_0001>

<llo_original>
// kernel: residual_block.1
$region0: #{residual_block.1}
  #allocation0 [shape = 'u32[]', space=smem, size = 0x4, offset = 0x4, fixed_abs, tag = 'smem constant byte address 0x4 - core index']
  #allocation1 [shape = 'u32[144,128]{1,0:T(1,128)}', space=vmem, size = 0x12000, scoped, tag = 'internal scratch']
  #allocation2 [shape = 'f32[36,512]{1,0:T(8,128)}', space=vmem, size = 0x14000, scoped, tag = 'scratch operand']
  %s0 = inlined_call_operand.vmem [shape: f32[4,512], index: 0, kind: input, shape index: {}]
  %s1 = inlined_call_operand.vmem [shape: f32[4,36], index: 1, kind: input, shape index: {}]
  %s2 = inlined_call_operand.vmem [shape: f32[4,1], index: 2, kind: input, shape index: {}]
  %s3 = inlined_call_operand.vmem [shape: f32[4,36], index: 3, kind: input, shape index: {}]
  %s4 = inlined_call_operand.vmem [shape: f32[4,1], index: 4, kind: input, shape index: {}]
  %s5 = inlined_call_operand.vmem [shape: f32[9,4,512], index: 5, kind: input, shape index: {}]
  %s6 = inlined_call_operand.vmem [shape: f32[4,512], index: 6, kind: output, shape index: {}]
  %s7 = sld [smem:[#allocation0]]
  $region34: #{residual_block.1} parent=0
    _
  %s9 = ssub.s32 1, %s7
  %s10 = scalar_select 0, %s9, %s7
  // Predicated region
  $region2: #{residual_block.1} parent=0 // pred_check
    _
  $region3: #{residual_block.1} parent=0 // pred_check_branch
    %12 = sbr.rel (0) target = $region5
  $region4: #{residual_block.1} parent=0 // pred_region
    _
  $region5: #{residual_block.1} parent=0 // pred_fallthru
    _
  // Predicated region
  $region6: #{residual_block.1} parent=0 // pred_check
    _
  $region7: #{residual_block.1} parent=0 // pred_check_branch
    %14 = sbr.rel (0) target = $region9
  $region8: #{residual_block.1} parent=0 // pred_region
    _
  $region9: #{residual_block.1} parent=0 // pred_fallthru
    _
  // Predicated region
  $region10: #{residual_block.1} parent=0 // pred_check
    _
  $region11: #{residual_block.1} parent=0 // pred_check_branch
    %16 = sbr.rel (0) target = $region13
  $region12: #{residual_block.1} parent=0 // pred_region
    _
  $region13: #{residual_block.1} parent=0 // pred_fallthru
    _
  // Predicated region
  $region14: #{residual_block.1} parent=0 // pred_check
    _
  $region15: #{residual_block.1} parent=0 // pred_check_branch
    %18 = sbr.rel (0) target = $region17
  $region16: #{residual_block.1} parent=0 // pred_region
    _
  $region17: #{residual_block.1} parent=0 // pred_fallthru
    _
  // Predicated region
  $region18: #{residual_block.1} parent=0 // pred_check
    _
  $region19: #{residual_block.1} parent=0 // pred_check_branch
    %20 = sbr.rel (0) target = $region21
  $region20: #{residual_block.1} parent=0 // pred_region
    _
  $region21: #{residual_block.1} parent=0 // pred_fallthru
    _
  // Predicated region
  $region22: #{residual_block.1} parent=0 // pred_check
    _
  $region23: #{residual_block.1} parent=0 // pred_check_branch
    %22 = sbr.rel (0) target = $region25
  $region24: #{residual_block.1} parent=0 // pred_region
    _
  $region25: #{residual_block.1} parent=0 // pred_fallthru
    _
  %v23 = vld [vmem:[%s0] sm:$0xff]
  %v24 = vld [vmem:[%s0 + $0x8] sm:$0xff]
  %v25 = vmax.f32 %v23, 0.0
  %v26 = vmax.f32 %v24, 0.0
  %v29 = vcombine.high %v25, %v25
  %v30 = vcombine.high %v26, %v26
  %33 = vrot.lane.b32.xlu0 %v25, 17
  %v34 = vpop.permute.xlu0 %33
  %35 = vrot.lane.b32.xlu0 %v29, 17
  %v36 = vpop.permute.xlu0 %35
  %37 = vrot.lane.b32.xlu0 %v26, 17
  %v38 = vpop.permute.xlu0 %37
  %39 = vrot.lane.b32.xlu0 %v30, 17
  %v40 = vpop.permute.xlu0 %39
  %v41 = vlaneseq
  %v42 = vand.u32 %v41, 127
  %vm43 = vcmp.lt.s32.totalorder %v42, 17
  %v44 = vsel %vm43, %v38, %v40
  %v45 = vsel %vm43, %v36, %v38
  %v46 = vsel %vm43, %v34, %v36
  %v47 = vsel %vm43, %v40, %v34
  %v48 = vld [vmem:[%s5] sm:$0xff]
  %v49 = vld [vmem:[%s5 + $0x8] sm:$0xff]
  %v52 = vcombine.high %v48, %v48
  %v53 = vcombine.high %v49, %v49
  %v56 = vmul.f32 %v47, %v48
  %v57 = vmul.f32 %v46, %v52
  %v58 = vmul.f32 %v45, %v49
  %v59 = vmul.f32 %v44, %v53
  %60 = vst [vmem:[#allocation2] sm:$0xf] %v56
  %61 = vst [vmem:[#allocation2 + $0x8] sm:$0xf] %v57
  %62 = vst [vmem:[#allocation2 + $0x10] sm:$0xf] %v58
  %63 = vst [vmem:[#allocation2 + $0x18] sm:$0xf] %v59
  %64 = vrot.lane.b32.xlu0 %v25, 16
  %v65 = vpop.permute.xlu0 %64
  %66 = vrot.lane.b32.xlu0 %v29, 16
  %v67 = vpop.permute.xlu0 %66
  %68 = vrot.lane.b32.xlu0 %v26, 16
  %v69 = vpop.permute.xlu0 %68
  %70 = vrot.lane.b32.xlu0 %v30, 16
  %v71 = vpop.permute.xlu0 %70
  %vm72 = vcmp.lt.s32.totalorder %v42, 16
  %v73 = vsel %vm72, %v69, %v71
  %v74 = vsel %vm72, %v67, %v69
  %v75 = vsel %vm72, %v65, %v67
  %v76 = vsel %vm72, %v71, %v65
  %s77 = scalar_lea.vmem %s5, 16
  %v78 = vld [vmem:[%s77] sm:$0xff]
  %v79 = vld [vmem:[%s77 + $0x8] sm:$0xff]
  %v82 = vcombine.high %v78, %v78
  %v83 = vcombine.high %v79, %v79
  %v86 = vmul.f32 %v76, %v78
  %v87 = vmul.f32 %v75, %v82
  %v88 = vmul.f32 %v74, %v79
  %v89 = vmul.f32 %v73, %v83
  %v94 = vrot.slane %v86, 4
  %v95 = vrot.slane %v87, 4
  %v96 = vrot.slane %v88, 4
  %v97 = vrot.slane %v89, 4
  %102 = vst [vmem:[#allocation2] sm:$0xf0] %v94
  %103 = vst [vmem:[#allocation2 + $0x8] sm:$0xf0] %v95
  %104 = vst [vmem:[#allocation2 + $0x10] sm:$0xf0] %v96
  %105 = vst [vmem:[#allocation2 + $0x18] sm:$0xf0] %v97
  %106 = vrot.lane.b32.xlu0 %v25, 15
  %v107 = vpop.permute.xlu0 %106
  %108 = vrot.lane.b32.xlu0 %v29, 15
  %v109 = vpop.permute.xlu0 %108
  %110 = vrot.lane.b32.xlu0 %v26, 15
  %v111 = vpop.permute.xlu0 %110
  %112 = vrot.lane.b32.xlu0 %v30, 15
  %v113 = vpop.permute.xlu0 %112
  %vm114 = vcmp.lt.s32.totalorder %v42, 15
  %v115 = vsel %vm114, %v111, %v113
  %v116 = vsel %vm114, %v109, %v111
  %v117 = vsel %vm114, %v107, %v109
  %v118 = vsel %vm114, %v113, %v107
  %s119 = scalar_lea.vmem %s5, 32
  %v120 = vld [vmem:[%s119] sm:$0xff]
  %v121 = vld [vmem:[%s119 + $0x8] sm:$0xff]
  %v124 = vcombine.high %v120, %v120
  %v125 = vcombine.high %v121, %v121
  %v128 = vmul.f32 %v118, %v120
  %v129 = vmul.f32 %v117, %v124
  %v130 = vmul.f32 %v116, %v121
  %v131 = vmul.f32 %v115, %v125
  %132 = vst [vmem:[#allocation2 + $0x20] sm:$0xf] %v128
  %133 = vst [vmem:[#allocation2 + $0x28] sm:$0xf] %v129
  %134 = vst [vmem:[#allocation2 + $0x30] sm:$0xf] %v130
  %135 = vst [vmem:[#allocation2 + $0x38] sm:$0xf] %v131
  %136 = vrot.lane.b32.xlu0 %v25, 1
  %v137 = vpop.permute.xlu0 %136
  %138 = vrot.lane.b32.xlu0 %v29, 1
  %v139 = vpop.permute.xlu0 %138
  %140 = vrot.lane.b32.xlu0 %v26, 1
  %v141 = vpop.permute.xlu0 %140
  %142 = vrot.lane.b32.xlu0 %v30, 1
  %v143 = vpop.permute.xlu0 %142
  %vm144 = vcmp.lt.s32.totalorder %v42, 1
  %v145 = vsel %vm144, %v141, %v143
  %v146 = vsel %vm144, %v139, %v141
  %v147 = vsel %vm144, %v137, %v139
  %v148 = vsel %vm144, %v143, %v137
  %s149 = scalar_lea.vmem %s5, 48
  %v150 = vld [vmem:[%s149] sm:$0xff]
  %v151 = vld [vmem:[%s149 + $0x8] sm:$0xff]
  %v154 = vcombine.high %v150, %v150
  %v155 = vcombine.high %v151, %v151
  %v158 = vmul.f32 %v148, %v150
  %v159 = vmul.f32 %v147, %v154
  %v160 = vmul.f32 %v146, %v151
  %v161 = vmul.f32 %v145, %v155
  %v166 = vrot.slane %v158, 4
  %v167 = vrot.slane %v159, 4
  %v168 = vrot.slane %v160, 4
  %v169 = vrot.slane %v161, 4
  %174 = vst [vmem:[#allocation2 + $0x20] sm:$0xf0] %v166
  %175 = vst [vmem:[#allocation2 + $0x28] sm:$0xf0] %v167
  %176 = vst [vmem:[#allocation2 + $0x30] sm:$0xf0] %v168
  %177 = vst [vmem:[#allocation2 + $0x38] sm:$0xf0] %v169
  %178 = vst [vmem:[#allocation2 + $0x40] sm:$0xf] %v25
  %179 = vst [vmem:[#allocation2 + $0x48] sm:$0xf] %v29
  %180 = vst [vmem:[#allocation2 + $0x50] sm:$0xf] %v26
  %181 = vst [vmem:[#allocation2 + $0x58] sm:$0xf] %v30
  %182 = vrot.lane.b32.xlu0 %v25, 127
  %v183 = vpop.permute.xlu0 %182
  %184 = vrot.lane.b32.xlu0 %v29, 127
  %v185 = vpop.permute.xlu0 %184
  %186 = vrot.lane.b32.xlu0 %v26, 127
  %v187 = vpop.permute.xlu0 %186
  %188 = vrot.lane.b32.xlu0 %v30, 127
  %v189 = vpop.permute.xlu0 %188
  %vm190 = vcmp.lt.s32.totalorder %v42, 127
  %v191 = vsel %vm190, %v187, %v189
  %v192 = vsel %vm190, %v185, %v187
  %v193 = vsel %vm190, %v183, %v185
  %v194 = vsel %vm190, %v189, %v183
  %s195 = scalar_lea.vmem %s5, 80
  %v196 = vld [vmem:[%s195] sm:$0xff]
  %v197 = vld [vmem:[%s195 + $0x8] sm:$0xff]
  %v200 = vcombine.high %v196, %v196
  %v201 = vcombine.high %v197, %v197
  %v204 = vmul.f32 %v193, %v196
  %v205 = vmul.f32 %v192, %v200
  %v206 = vmul.f32 %v191, %v197
  %v207 = vmul.f32 %v194, %v201
  %v212 = vrot.slane %v204, 4
  %v213 = vrot.slane %v205, 4
  %v214 = vrot.slane %v206, 4
  %v215 = vrot.slane %v207, 4
  %220 = vst [vmem:[#allocation2 + $0x40] sm:$0xf0] %v212
  %221 = vst [vmem:[#allocation2 + $0x48] sm:$0xf0] %v213
  %222 = vst [vmem:[#allocation2 + $0x50] sm:$0xf0] %v214
  %223 = vst [vmem:[#allocation2 + $0x58] sm:$0xf0] %v215
  %224 = vrot.lane.b32.xlu0 %v25, 113
  %v225 = vpop.permute.xlu0 %224
  %226 = vrot.lane.b32.xlu0 %v29, 113
  %v227 = vpop.permute.xlu0 %226
  %228 = vrot.lane.b32.xlu0 %v26, 113
  %v229 = vpop.permute.xlu0 %228
  %230 = vrot.lane.b32.xlu0 %v30, 113
  %v231 = vpop.permute.xlu0 %230
  %vm232 = vcmp.lt.s32.totalorder %v42, 113
  %v233 = vsel %vm232, %v229, %v231
  %v234 = vsel %vm232, %v227, %v229
  %v235 = vsel %vm232, %v225, %v227
  %v236 = vsel %vm232, %v231, %v225
  %s237 = scalar_lea.vmem %s5, 96
  %v238 = vld [vmem:[%s237] sm:$0xff]
  %v239 = vld [vmem:[%s237 + $0x8] sm:$0xff]
  %v242 = vcombine.high %v238, %v238
  %v243 = vcombine.high %v239, %v239
  %v246 = vmul.f32 %v235, %v238
  %v247 = vmul.f32 %v234, %v242
  %v248 = vmul.f32 %v233, %v239
  %v249 = vmul.f32 %v236, %v243
  %250 = vst [vmem:[#allocation2 + $0x60] sm:$0xf] %v246
  %251 = vst [vmem:[#allocation2 + $0x68] sm:$0xf] %v247
  %252 = vst [vmem:[#allocation2 + $0x70] sm:$0xf] %v248
  %253 = vst [vmem:[#allocation2 + $0x78] sm:$0xf] %v249
  %254 = vrot.lane.b32.xlu0 %v25, 112
  %v255 = vpop.permute.xlu0 %254
  %256 = vrot.lane.b32.xlu0 %v29, 112
  %v257 = vpop.permute.xlu0 %256
  %258 = vrot.lane.b32.xlu0 %v26, 112
  %v259 = vpop.permute.xlu0 %258
  %260 = vrot.lane.b32.xlu0 %v30, 112
  %v261 = vpop.permute.xlu0 %260
  %vm262 = vcmp.lt.s32.totalorder %v42, 112
  %v263 = vsel %vm262, %v259, %v261
  %v264 = vsel %vm262, %v257, %v259
  %v265 = vsel %vm262, %v255, %v257
  %v266 = vsel %vm262, %v261, %v255
  %s267 = scalar_lea.vmem %s5, 112
  %v268 = vld [vmem:[%s267] sm:$0xff]
  %v269 = vld [vmem:[%s267 + $0x8] sm:$0xff]
  %v272 = vcombine.high %v268, %v268
  %v273 = vcombine.high %v269, %v269
  %v276 = vmul.f32 %v265, %v268
  %v277 = vmul.f32 %v264, %v272
  %v278 = vmul.f32 %v263, %v269
  %v279 = vmul.f32 %v266, %v273
  %v284 = vrot.slane %v276, 4
  %v285 = vrot.slane %v277, 4
  %v286 = vrot.slane %v278, 4
  %v287 = vrot.slane %v279, 4
  %292 = vst [vmem:[#allocation2 + $0x60] sm:$0xf0] %v284
  %293 = vst [vmem:[#allocation2 + $0x68] sm:$0xf0] %v285
  %294 = vst [vmem:[#allocation2 + $0x70] sm:$0xf0] %v286
  %295 = vst [vmem:[#allocation2 + $0x78] sm:$0xf0] %v287
  %296 = vrot.lane.b32.xlu0 %v25, 111
  %v297 = vpop.permute.xlu0 %296
  %298 = vrot.lane.b32.xlu0 %v29, 111
  %v299 = vpop.permute.xlu0 %298
  %300 = vrot.lane.b32.xlu0 %v26, 111
  %v301 = vpop.permute.xlu0 %300
  %302 = vrot.lane.b32.xlu0 %v30, 111
  %v303 = vpop.permute.xlu0 %302
  %vm304 = vcmp.lt.s32.totalorder %v42, 111
  %v305 = vsel %vm304, %v301, %v303
  %v306 = vsel %vm304, %v299, %v301
  %v307 = vsel %vm304, %v297, %v299
  %v308 = vsel %vm304, %v303, %v297
  %s309 = scalar_lea.vmem %s5, 128
  %v310 = vld [vmem:[%s309] sm:$0xff]
  %v311 = vld [vmem:[%s309 + $0x8] sm:$0xff]
  %v314 = vcombine.high %v310, %v310
  %v315 = vcombine.high %v311, %v311
  %v318 = vmul.f32 %v307, %v310
  %v319 = vmul.f32 %v306, %v314
  %v320 = vmul.f32 %v305, %v311
  %v321 = vmul.f32 %v308, %v315
  %322 = vst [vmem:[#allocation2 + $0x80] sm:$0xf] %v318
  %323 = vst [vmem:[#allocation2 + $0x88] sm:$0xf] %v319
  %324 = vst [vmem:[#allocation2 + $0x90] sm:$0xf] %v320
  %325 = vst [vmem:[#allocation2 + $0x98] sm:$0xf] %v321
  %v326 = vld [vmem:[%s1] sm:$0xf]
  %v327 = vld [vmem:[#allocation2] sm:$0xff]
  %v328 = vld [vmem:[#allocation2 + $0x8] sm:$0xff]
  %v329 = vld [vmem:[#allocation2 + $0x10] sm:$0xff]
  %v330 = vld [vmem:[#allocation2 + $0x18] sm:$0xff]
  %v331 = vld [vmem:[#allocation2 + $0x20] sm:$0xff]
  %v332 = vld [vmem:[#allocation2 + $0x28] sm:$0xff]
  %v333 = vld [vmem:[#allocation2 + $0x30] sm:$0xff]
  %v334 = vld [vmem:[#allocation2 + $0x38] sm:$0xff]
  %v335 = vld [vmem:[#allocation2 + $0x40] sm:$0xff]
  %v336 = vld [vmem:[#allocation2 + $0x48] sm:$0xff]
  %v337 = vld [vmem:[#allocation2 + $0x50] sm:$0xff]
  %v338 = vld [vmem:[#allocation2 + $0x58] sm:$0xff]
  %v339 = vld [vmem:[#allocation2 + $0x60] sm:$0xff]
  %v340 = vld [vmem:[#allocation2 + $0x68] sm:$0xff]
  %v341 = vld [vmem:[#allocation2 + $0x70] sm:$0xff]
  %v342 = vld [vmem:[#allocation2 + $0x78] sm:$0xff]
  %v343 = vld [vmem:[#allocation2 + $0x80] sm:$0xf]
  %v344 = vld [vmem:[#allocation2 + $0x88] sm:$0xf]
  %v345 = vld [vmem:[#allocation2 + $0x90] sm:$0xf]
  %v346 = vld [vmem:[#allocation2 + $0x98] sm:$0xf]
  %v347 = vld [vmem:[%s2] sm:$0xf]
  %349 = vset.pattern.permute.xlu0 0
  %350 = vperm.xlu0 %349, %v347
  %v351 = vpop.permute.xlu0 %350
  %vm353 = vcmask 293888
  %v355 = vsel %vm353, %v326, 0
  %vm357 = vcmask 1043456
  %v359 = vsel %vm357, %v343, 0
  %v362 = vsel %vm357, %v344, 0
  %v365 = vsel %vm357, %v345, 0
  %v368 = vsel %vm357, %v346, 0
  %370 = vmatprep.subr.mxu0 %v328
  %371 = vmatpush1.msra.mxu0 %v327
  %372 = vmatprep.subr.mxu0 %v332
  %373 = vmatpush1.msra.mxu0 %v331
  %374 = vmatprep.subr.mxu0 %v336
  %375 = vmatpush1.msra.mxu0 %v335
  %376 = vmatprep.subr.mxu0 %v340
  %377 = vmatpush1.msra.mxu0 %v339
  %378 = vmatprep.subr.mxu0 %v362
  %379 = vmatpush1.msra.mxu0 %v359
  %380 = vmatprep.subr.mxu0 0.0
  %381 = vmatpush1.msra.mxu0 0.0
  %382 = vmatprep.subr.mxu0 0.0
  %383 = vmatpush1.msra.mxu0 0.0
  %384 = vmatprep.subr.mxu0 0.0
  %385 = vmatpush1.msra.mxu0 0.0
  %386 = vmatprep.subr.mxu0 0.0
  %387 = vmatpush1.msra.mxu0 0.0
  %388 = vmatprep.subr.mxu0 0.0
  %389 = vmatpush1.msra.mxu0 0.0
  %390 = vmatprep.subr.mxu0 0.0
  %391 = vmatpush1.msra.mxu0 0.0
  %392 = vmatprep.subr.mxu0 0.0
  %393 = vmatpush1.msra.mxu0 0.0
  %394 = vmatprep.subr.mxu0 0.0
  %395 = vmatpush1.msra.mxu0 0.0
  %396 = vmatprep.subr.mxu0 0.0
  %397 = vmatpush1.msra.mxu0 0.0
  %398 = vmatprep.subr.mxu0 0.0
  %399 = vmatpush1.msra.mxu0 0.0
  %400 = vmatprep.subr.mxu0 0.0
  %401 = vmatpush1.msra.mxu0 0.0
  %402 = vmatprep.subr.mxu0 0.0
  %403 = vmatpush1.msra.mxu0 0.0
  %404 = vmatprep.subr.mxu0 0.0
  %405 = vmatpush1.msra.mxu0 0.0
  %406 = vmatprep.subr.mxu0 0.0
  %407 = vmatpush1.msra.mxu0 0.0
  %408 = vmatprep.subr.mxu0 0.0
  %409 = vmatpush1.msra.mxu0 0.0
  %410 = vmatprep.subr.mxu0 0.0
  %411 = vmatpush1.msra.mxu0 0.0
  %412 = vmatprep.subr.mxu0 0.0
  %413 = vmatpush1.msra.mxu0 0.0
  %414 = vmatprep.subr.mxu0 0.0
  %415 = vmatpush1.msra.mxu0 0.0
  %416 = vmatprep.subr.mxu0 0.0
  %417 = vmatpush1.msra.mxu0 0.0
  %418 = vmatprep.subr.mxu0 0.0
  %419 = vmatpush1.msra.mxu0 0.0
  %420 = vmatprep.subr.mxu0 0.0
  %421 = vmatpush1.msra.mxu0 0.0
  %422 = vmatprep.subr.mxu0 0.0
  %423 = vmatpush1.msra.mxu0 0.0
  %424 = vmatprep.subr.mxu0 0.0
  %425 = vmatpush1.msra.mxu0 0.0
  %426 = vmatprep.subr.mxu0 0.0
  %427 = vmatpush1.msra.mxu0 0.0
  %428 = vmatprep.subr.mxu0 0.0
  %429 = vmatpush1.msra.mxu0 0.0
  %430 = vmatprep.subr.mxu0 0.0
  %431 = vmatpush1.msra.mxu0 0.0
  %432 = vmatprep.subr.mxu0 0.0
  %433 = vmatpush1.msra.mxu0 0.0
  %434 = vmatprep.mubr.f32.mxu0 0.0
  %435 = vmatmul.mubr.f32.gmra.mrb[0].mxu0 %v355
  %v436 = vpop.f32.mrb[0].mxu0
  %v437 = vadd.f32 %v351, %v436
  %v438 = vpop.f32.mrb[0].mxu0
  %v439 = vadd.f32 %v351, %v438
  %440 = vdwg.mxu0
  %441 = vmatprep.subr.mxu0 %v330
  %442 = vmatpush1.msra.mxu0 %v329
  %443 = vmatprep.subr.mxu0 %v334
  %444 = vmatpush1.msra.mxu0 %v333
  %445 = vmatprep.subr.mxu0 %v338
  %446 = vmatpush1.msra.mxu0 %v337
  %447 = vmatprep.subr.mxu0 %v342
  %448 = vmatpush1.msra.mxu0 %v341
  %449 = vmatprep.subr.mxu0 %v368
  %450 = vmatpush1.msra.mxu0 %v365
  %451 = vmatprep.subr.mxu0 0.0
  %452 = vmatpush1.msra.mxu0 0.0
  %453 = vmatprep.subr.mxu0 0.0
  %454 = vmatpush1.msra.mxu0 0.0
  %455 = vmatprep.subr.mxu0 0.0
  %456 = vmatpush1.msra.mxu0 0.0
  %457 = vmatprep.subr.mxu0 0.0
  %458 = vmatpush1.msra.mxu0 0.0
  %459 = vmatprep.subr.mxu0 0.0
  %460 = vmatpush1.msra.mxu0 0.0
  %461 = vmatprep.subr.mxu0 0.0
  %462 = vmatpush1.msra.mxu0 0.0
  %463 = vmatprep.subr.mxu0 0.0
  %464 = vmatpush1.msra.mxu0 0.0
  %465 = vmatprep.subr.mxu0 0.0
  %466 = vmatpush1.msra.mxu0 0.0
  %467 = vmatprep.subr.mxu0 0.0
  %468 = vmatpush1.msra.mxu0 0.0
  %469 = vmatprep.subr.mxu0 0.0
  %470 = vmatpush1.msra.mxu0 0.0
  %471 = vmatprep.subr.mxu0 0.0
  %472 = vmatpush1.msra.mxu0 0.0
  %473 = vmatprep.subr.mxu0 0.0
  %474 = vmatpush1.msra.mxu0 0.0
  %475 = vmatprep.subr.mxu0 0.0
  %476 = vmatpush1.msra.mxu0 0.0
  %477 = vmatprep.subr.mxu0 0.0
  %478 = vmatpush1.msra.mxu0 0.0
  %479 = vmatprep.subr.mxu0 0.0
  %480 = vmatpush1.msra.mxu0 0.0
  %481 = vmatprep.subr.mxu0 0.0
  %482 = vmatpush1.msra.mxu0 0.0
  %483 = vmatprep.subr.mxu0 0.0
  %484 = vmatpush1.msra.mxu0 0.0
  %485 = vmatprep.subr.mxu0 0.0
  %486 = vmatpush1.msra.mxu0 0.0
  %487 = vmatprep.subr.mxu0 0.0
  %488 = vmatpush1.msra.mxu0 0.0
  %489 = vmatprep.subr.mxu0 0.0
  %490 = vmatpush1.msra.mxu0 0.0
  %491 = vmatprep.subr.mxu0 0.0
  %492 = vmatpush1.msra.mxu0 0.0
  %493 = vmatprep.subr.mxu0 0.0
  %494 = vmatpush1.msra.mxu0 0.0
  %495 = vmatprep.subr.mxu0 0.0
  %496 = vmatpush1.msra.mxu0 0.0
  %497 = vmatprep.subr.mxu0 0.0
  %498 = vmatpush1.msra.mxu0 0.0
  %499 = vmatprep.subr.mxu0 0.0
  %500 = vmatpush1.msra.mxu0 0.0
  %501 = vmatprep.subr.mxu0 0.0
  %502 = vmatpush1.msra.mxu0 0.0
  %503 = vmatprep.subr.mxu0 0.0
  %504 = vmatpush1.msra.mxu0 0.0
  %505 = vmatprep.mubr.f32.mxu0 0.0
  %506 = vmatmul.mubr.f32.gmra.mrb[0].mxu0 %v355
  %v507 = vpop.f32.mrb[0].mxu0
  %v508 = vadd.f32 %v351, %v507
  %v509 = vpop.f32.mrb[0].mxu0
  %v510 = vadd.f32 %v351, %v509
  %511 = vdwg.mxu0
  %v512 = vmax.f32 %v437, 0.0
  %v513 = vmax.f32 %v439, 0.0
  %v514 = vmax.f32 %v508, 0.0
  %v515 = vmax.f32 %v510, 0.0
  %516 = vrot.lane.b32.xlu0 %v512, 17
  %v517 = vpop.permute.xlu0 %516
  %518 = vrot.lane.b32.xlu0 %v513, 17
  %v519 = vpop.permute.xlu0 %518
  %520 = vrot.lane.b32.xlu0 %v514, 17
  %v521 = vpop.permute.xlu0 %520
  %522 = vrot.lane.b32.xlu0 %v515, 17
  %v523 = vpop.permute.xlu0 %522
  %v524 = vsel %vm43, %v521, %v523
  %v525 = vsel %vm43, %v519, %v521
  %v526 = vsel %vm43, %v517, %v519
  %v527 = vsel %vm43, %v523, %v517
  %v528 = vld [vmem:[%s5] sm:$0xff]
  %v529 = vld [vmem:[%s5 + $0x8] sm:$0xff]
  %v532 = vcombine.high %v528, %v528
  %v533 = vcombine.high %v529, %v529
  %v536 = vmul.f32 %v527, %v528
  %v537 = vmul.f32 %v526, %v532
  %v538 = vmul.f32 %v525, %v529
  %v539 = vmul.f32 %v524, %v533
  %540 = vst [vmem:[#allocation2] sm:$0xf] %v536
  %541 = vst [vmem:[#allocation2 + $0x8] sm:$0xf] %v537
  %542 = vst [vmem:[#allocation2 + $0x10] sm:$0xf] %v538
  %543 = vst [vmem:[#allocation2 + $0x18] sm:$0xf] %v539
  %544 = vrot.lane.b32.xlu0 %v512, 16
  %v545 = vpop.permute.xlu0 %544
  %546 = vrot.lane.b32.xlu0 %v513, 16
  %v547 = vpop.permute.xlu0 %546
  %548 = vrot.lane.b32.xlu0 %v514, 16
  %v549 = vpop.permute.xlu0 %548
  %550 = vrot.lane.b32.xlu0 %v515, 16
  %v551 = vpop.permute.xlu0 %550
  %v552 = vsel %vm72, %v549, %v551
  %v553 = vsel %vm72, %v547, %v549
  %v554 = vsel %vm72, %v545, %v547
  %v555 = vsel %vm72, %v551, %v545
  %v556 = vld [vmem:[%s77] sm:$0xff]
  %v557 = vld [vmem:[%s77 + $0x8] sm:$0xff]
  %v560 = vcombine.high %v556, %v556
  %v561 = vcombine.high %v557, %v557
  %v564 = vmul.f32 %v555, %v556
  %v565 = vmul.f32 %v554, %v560
  %v566 = vmul.f32 %v553, %v557
  %v567 = vmul.f32 %v552, %v561
  %v572 = vrot.slane %v564, 4
  %v573 = vrot.slane %v565, 4
  %v574 = vrot.slane %v566, 4
  %v575 = vrot.slane %v567, 4
  %580 = vst [vmem:[#allocation2] sm:$0xf0] %v572
  %581 = vst [vmem:[#allocation2 + $0x8] sm:$0xf0] %v573
  %582 = vst [vmem:[#allocation2 + $0x10] sm:$0xf0] %v574
  %583 = vst [vmem:[#allocation2 + $0x18] sm:$0xf0] %v575
  %584 = vrot.lane.b32.xlu0 %v512, 15
  %v585 = vpop.permute.xlu0 %584
  %586 = vrot.lane.b32.xlu0 %v513, 15
  %v587 = vpop.permute.xlu0 %586
  %588 = vrot.lane.b32.xlu0 %v514, 15
  %v589 = vpop.permute.xlu0 %588
  %590 = vrot.lane.b32.xlu0 %v515, 15
  %v591 = vpop.permute.xlu0 %590
  %v592 = vsel %vm114, %v589, %v591
  %v593 = vsel %vm114, %v587, %v589
  %v594 = vsel %vm114, %v585, %v587
  %v595 = vsel %vm114, %v591, %v585
  %v596 = vld [vmem:[%s119] sm:$0xff]
  %v597 = vld [vmem:[%s119 + $0x8] sm:$0xff]
  %v600 = vcombine.high %v596, %v596
  %v601 = vcombine.high %v597, %v597
  %v604 = vmul.f32 %v595, %v596
  %v605 = vmul.f32 %v594, %v600
  %v606 = vmul.f32 %v593, %v597
  %v607 = vmul.f32 %v592, %v601
  %608 = vst [vmem:[#allocation2 + $0x20] sm:$0xf] %v604
  %609 = vst [vmem:[#allocation2 + $0x28] sm:$0xf] %v605
  %610 = vst [vmem:[#allocation2 + $0x30] sm:$0xf] %v606
  %611 = vst [vmem:[#allocation2 + $0x38] sm:$0xf] %v607
  %612 = vrot.lane.b32.xlu0 %v512, 1
  %v613 = vpop.permute.xlu0 %612
  %614 = vrot.lane.b32.xlu0 %v513, 1
  %v615 = vpop.permute.xlu0 %614
  %616 = vrot.lane.b32.xlu0 %v514, 1
  %v617 = vpop.permute.xlu0 %616
  %618 = vrot.lane.b32.xlu0 %v515, 1
  %v619 = vpop.permute.xlu0 %618
  %v620 = vsel %vm144, %v617, %v619
  %v621 = vsel %vm144, %v615, %v617
  %v622 = vsel %vm144, %v613, %v615
  %v623 = vsel %vm144, %v619, %v613
  %v624 = vld [vmem:[%s149] sm:$0xff]
  %v625 = vld [vmem:[%s149 + $0x8] sm:$0xff]
  %v628 = vcombine.high %v624, %v624
  %v629 = vcombine.high %v625, %v625
  %v632 = vmul.f32 %v623, %v624
  %v633 = vmul.f32 %v622, %v628
  %v634 = vmul.f32 %v621, %v625
  %v635 = vmul.f32 %v620, %v629
  %v640 = vrot.slane %v632, 4
  %v641 = vrot.slane %v633, 4
  %v642 = vrot.slane %v634, 4
  %v643 = vrot.slane %v635, 4
  %648 = vst [vmem:[#allocation2 + $0x20] sm:$0xf0] %v640
  %649 = vst [vmem:[#allocation2 + $0x28] sm:$0xf0] %v641
  %650 = vst [vmem:[#allocation2 + $0x30] sm:$0xf0] %v642
  %651 = vst [vmem:[#allocation2 + $0x38] sm:$0xf0] %v643
  %652 = vst [vmem:[#allocation2 + $0x40] sm:$0xf] %v512
  %653 = vst [vmem:[#allocation2 + $0x48] sm:$0xf] %v513
  %654 = vst [vmem:[#allocation2 + $0x50] sm:$0xf] %v514
  %655 = vst [vmem:[#allocation2 + $0x58] sm:$0xf] %v515
  %656 = vrot.lane.b32.xlu0 %v512, 127
  %v657 = vpop.permute.xlu0 %656
  %658 = vrot.lane.b32.xlu0 %v513, 127
  %v659 = vpop.permute.xlu0 %658
  %660 = vrot.lane.b32.xlu0 %v514, 127
  %v661 = vpop.permute.xlu0 %660
  %662 = vrot.lane.b32.xlu0 %v515, 127
  %v663 = vpop.permute.xlu0 %662
  %v664 = vsel %vm190, %v661, %v663
  %v665 = vsel %vm190, %v659, %v661
  %v666 = vsel %vm190, %v657, %v659
  %v667 = vsel %vm190, %v663, %v657
  %v668 = vld [vmem:[%s195] sm:$0xff]
  %v669 = vld [vmem:[%s195 + $0x8] sm:$0xff]
  %v672 = vcombine.high %v668, %v668
  %v673 = vcombine.high %v669, %v669
  %v676 = vmul.f32 %v666, %v668
  %v677 = vmul.f32 %v665, %v672
  %v678 = vmul.f32 %v664, %v669
  %v679 = vmul.f32 %v667, %v673
  %v684 = vrot.slane %v676, 4
  %v685 = vrot.slane %v677, 4
  %v686 = vrot.slane %v678, 4
  %v687 = vrot.slane %v679, 4
  %692 = vst [vmem:[#allocation2 + $0x40] sm:$0xf0] %v684
  %693 = vst [vmem:[#allocation2 + $0x48] sm:$0xf0] %v685
  %694 = vst [vmem:[#allocation2 + $0x50] sm:$0xf0] %v686
  %695 = vst [vmem:[#allocation2 + $0x58] sm:$0xf0] %v687
  %696 = vrot.lane.b32.xlu0 %v512, 113
  %v697 = vpop.permute.xlu0 %696
  %698 = vrot.lane.b32.xlu0 %v513, 113
  %v699 = vpop.permute.xlu0 %698
  %700 = vrot.lane.b32.xlu0 %v514, 113
  %v701 = vpop.permute.xlu0 %700
  %702 = vrot.lane.b32.xlu0 %v515, 113
  %v703 = vpop.permute.xlu0 %702
  %v704 = vsel %vm232, %v701, %v703
  %v705 = vsel %vm232, %v699, %v701
  %v706 = vsel %vm232, %v697, %v699
  %v707 = vsel %vm232, %v703, %v697
  %v708 = vld [vmem:[%s237] sm:$0xff]
  %v709 = vld [vmem:[%s237 + $0x8] sm:$0xff]
  %v712 = vcombine.high %v708, %v708
  %v713 = vcombine.high %v709, %v709
  %v716 = vmul.f32 %v706, %v708
  %v717 = vmul.f32 %v705, %v712
  %v718 = vmul.f32 %v704, %v709
  %v719 = vmul.f32 %v707, %v713
  %720 = vst [vmem:[#allocation2 + $0x60] sm:$0xf] %v716
  %721 = vst [vmem:[#allocation2 + $0x68] sm:$0xf] %v717
  %722 = vst [vmem:[#allocation2 + $0x70] sm:$0xf] %v718
  %723 = vst [vmem:[#allocation2 + $0x78] sm:$0xf] %v719
  %724 = vrot.lane.b32.xlu0 %v512, 112
  %v725 = vpop.permute.xlu0 %724
  %726 = vrot.lane.b32.xlu0 %v513, 112
  %v727 = vpop.permute.xlu0 %726
  %728 = vrot.lane.b32.xlu0 %v514, 112
  %v729 = vpop.permute.xlu0 %728
  %730 = vrot.lane.b32.xlu0 %v515, 112
  %v731 = vpop.permute.xlu0 %730
  %v732 = vsel %vm262, %v729, %v731
  %v733 = vsel %vm262, %v727, %v729
  %v734 = vsel %vm262, %v725, %v727
  %v735 = vsel %vm262, %v731, %v725
  %v736 = vld [vmem:[%s267] sm:$0xff]
  %v737 = vld [vmem:[%s267 + $0x8] sm:$0xff]
  %v740 = vcombine.high %v736, %v736
  %v741 = vcombine.high %v737, %v737
  %v744 = vmul.f32 %v734, %v736
  %v745 = vmul.f32 %v733, %v740
  %v746 = vmul.f32 %v732, %v737
  %v747 = vmul.f32 %v735, %v741
  %v752 = vrot.slane %v744, 4
  %v753 = vrot.slane %v745, 4
  %v754 = vrot.slane %v746, 4
  %v755 = vrot.slane %v747, 4
  %760 = vst [vmem:[#allocation2 + $0x60] sm:$0xf0] %v752
  %761 = vst [vmem:[#allocation2 + $0x68] sm:$0xf0] %v753
  %762 = vst [vmem:[#allocation2 + $0x70] sm:$0xf0] %v754
  %763 = vst [vmem:[#allocation2 + $0x78] sm:$0xf0] %v755
  %764 = vrot.lane.b32.xlu0 %v512, 111
  %v765 = vpop.permute.xlu0 %764
  %766 = vrot.lane.b32.xlu0 %v513, 111
  %v767 = vpop.permute.xlu0 %766
  %768 = vrot.lane.b32.xlu0 %v514, 111
  %v769 = vpop.permute.xlu0 %768
  %770 = vrot.lane.b32.xlu0 %v515, 111
  %v771 = vpop.permute.xlu0 %770
  %v772 = vsel %vm304, %v769, %v771
  %v773 = vsel %vm304, %v767, %v769
  %v774 = vsel %vm304, %v765, %v767
  %v775 = vsel %vm304, %v771, %v765
  %v776 = vld [vmem:[%s309] sm:$0xff]
  %v777 = vld [vmem:[%s309 + $0x8] sm:$0xff]
  %v780 = vcombine.high %v776, %v776
  %v781 = vcombine.high %v777, %v777
  %v784 = vmul.f32 %v774, %v776
  %v785 = vmul.f32 %v773, %v780
  %v786 = vmul.f32 %v772, %v777
  %v787 = vmul.f32 %v775, %v781
  %788 = vst [vmem:[#allocation2 + $0x80] sm:$0xf] %v784
  %789 = vst [vmem:[#allocation2 + $0x88] sm:$0xf] %v785
  %790 = vst [vmem:[#allocation2 + $0x90] sm:$0xf] %v786
  %791 = vst [vmem:[#allocation2 + $0x98] sm:$0xf] %v787
  %v792 = vld [vmem:[%s3] sm:$0xf]
  %v793 = vld [vmem:[#allocation2] sm:$0xff]
  %v794 = vld [vmem:[#allocation2 + $0x8] sm:$0xff]
  %v795 = vld [vmem:[#allocation2 + $0x10] sm:$0xff]
  %v796 = vld [vmem:[#allocation2 + $0x18] sm:$0xff]
  %v797 = vld [vmem:[#allocation2 + $0x20] sm:$0xff]
  %v798 = vld [vmem:[#allocation2 + $0x28] sm:$0xff]
  %v799 = vld [vmem:[#allocation2 + $0x30] sm:$0xff]
  %v800 = vld [vmem:[#allocation2 + $0x38] sm:$0xff]
  %v801 = vld [vmem:[#allocation2 + $0x40] sm:$0xff]
  %v802 = vld [vmem:[#allocation2 + $0x48] sm:$0xff]
  %v803 = vld [vmem:[#allocation2 + $0x50] sm:$0xff]
  %v804 = vld [vmem:[#allocation2 + $0x58] sm:$0xff]
  %v805 = vld [vmem:[#allocation2 + $0x60] sm:$0xff]
  %v806 = vld [vmem:[#allocation2 + $0x68] sm:$0xff]
  %v807 = vld [vmem:[#allocation2 + $0x70] sm:$0xff]
  %v808 = vld [vmem:[#allocation2 + $0x78] sm:$0xff]
  %v809 = vld [vmem:[#allocation2 + $0x80] sm:$0xf]
  %v810 = vld [vmem:[#allocation2 + $0x88] sm:$0xf]
  %v811 = vld [vmem:[#allocation2 + $0x90] sm:$0xf]
  %v812 = vld [vmem:[#allocation2 + $0x98] sm:$0xf]
  %v813 = vld [vmem:[%s4] sm:$0xf]
  %815 = vset.pattern.permute.xlu0 0
  %816 = vperm.xlu0 %815, %v813
  %v817 = vpop.permute.xlu0 %816
  %v820 = vsel %vm353, %v792, 0
  %v823 = vsel %vm357, %v809, 0
  %v826 = vsel %vm357, %v810, 0
  %v829 = vsel %vm357, %v811, 0
  %v832 = vsel %vm357, %v812, 0
  %834 = vmatprep.subr.mxu0 %v794
  %835 = vmatpush1.msra.mxu0 %v793
  %836 = vmatprep.subr.mxu0 %v798
  %837 = vmatpush1.msra.mxu0 %v797
  %838 = vmatprep.subr.mxu0 %v802
  %839 = vmatpush1.msra.mxu0 %v801
  %840 = vmatprep.subr.mxu0 %v806
  %841 = vmatpush1.msra.mxu0 %v805
  %842 = vmatprep.subr.mxu0 %v826
  %843 = vmatpush1.msra.mxu0 %v823
  %844 = vmatprep.subr.mxu0 0.0
  %845 = vmatpush1.msra.mxu0 0.0
  %846 = vmatprep.subr.mxu0 0.0
  %847 = vmatpush1.msra.mxu0 0.0
  %848 = vmatprep.subr.mxu0 0.0
  %849 = vmatpush1.msra.mxu0 0.0
  %850 = vmatprep.subr.mxu0 0.0
  %851 = vmatpush1.msra.mxu0 0.0
  %852 = vmatprep.subr.mxu0 0.0
  %853 = vmatpush1.msra.mxu0 0.0
  %854 = vmatprep.subr.mxu0 0.0
  %855 = vmatpush1.msra.mxu0 0.0
  %856 = vmatprep.subr.mxu0 0.0
  %857 = vmatpush1.msra.mxu0 0.0
  %858 = vmatprep.subr.mxu0 0.0
  %859 = vmatpush1.msra.mxu0 0.0
  %860 = vmatprep.subr.mxu0 0.0
  %861 = vmatpush1.msra.mxu0 0.0
  %862 = vmatprep.subr.mxu0 0.0
  %863 = vmatpush1.msra.mxu0 0.0
  %864 = vmatprep.subr.mxu0 0.0
  %865 = vmatpush1.msra.mxu0 0.0
  %866 = vmatprep.subr.mxu0 0.0
  %867 = vmatpush1.msra.mxu0 0.0
  %868 = vmatprep.subr.mxu0 0.0
  %869 = vmatpush1.msra.mxu0 0.0
  %870 = vmatprep.subr.mxu0 0.0
  %871 = vmatpush1.msra.mxu0 0.0
  %872 = vmatprep.subr.mxu0 0.0
  %873 = vmatpush1.msra.mxu0 0.0
  %874 = vmatprep.subr.mxu0 0.0
  %875 = vmatpush1.msra.mxu0 0.0
  %876 = vmatprep.subr.mxu0 0.0
  %877 = vmatpush1.msra.mxu0 0.0
  %878 = vmatprep.subr.mxu0 0.0
  %879 = vmatpush1.msra.mxu0 0.0
  %880 = vmatprep.subr.mxu0 0.0
  %881 = vmatpush1.msra.mxu0 0.0
  %882 = vmatprep.subr.mxu0 0.0
  %883 = vmatpush1.msra.mxu0 0.0
  %884 = vmatprep.subr.mxu0 0.0
  %885 = vmatpush1.msra.mxu0 0.0
  %886 = vmatprep.subr.mxu0 0.0
  %887 = vmatpush1.msra.mxu0 0.0
  %888 = vmatprep.subr.mxu0 0.0
  %889 = vmatpush1.msra.mxu0 0.0
  %890 = vmatprep.subr.mxu0 0.0
  %891 = vmatpush1.msra.mxu0 0.0
  %892 = vmatprep.subr.mxu0 0.0
  %893 = vmatpush1.msra.mxu0 0.0
  %894 = vmatprep.subr.mxu0 0.0
  %895 = vmatpush1.msra.mxu0 0.0
  %896 = vmatprep.subr.mxu0 0.0
  %897 = vmatpush1.msra.mxu0 0.0
  %898 = vmatprep.mubr.f32.mxu0 0.0
  %899 = vmatmul.mubr.f32.gmra.mrb[0].mxu0 %v820
  %v900 = vpop.f32.mrb[0].mxu0
  %v901 = vadd.f32 %v817, %v900
  %v902 = vpop.f32.mrb[0].mxu0
  %v903 = vadd.f32 %v817, %v902
  %904 = vdwg.mxu0
  %905 = vmatprep.subr.mxu0 %v796
  %906 = vmatpush1.msra.mxu0 %v795
  %907 = vmatprep.subr.mxu0 %v800
  %908 = vmatpush1.msra.mxu0 %v799
  %909 = vmatprep.subr.mxu0 %v804
  %910 = vmatpush1.msra.mxu0 %v803
  %911 = vmatprep.subr.mxu0 %v808
  %912 = vmatpush1.msra.mxu0 %v807
  %913 = vmatprep.subr.mxu0 %v832
  %914 = vmatpush1.msra.mxu0 %v829
  %915 = vmatprep.subr.mxu0 0.0
  %916 = vmatpush1.msra.mxu0 0.0
  %917 = vmatprep.subr.mxu0 0.0
  %918 = vmatpush1.msra.mxu0 0.0
  %919 = vmatprep.subr.mxu0 0.0
  %920 = vmatpush1.msra.mxu0 0.0
  %921 = vmatprep.subr.mxu0 0.0
  %922 = vmatpush1.msra.mxu0 0.0
  %923 = vmatprep.subr.mxu0 0.0
  %924 = vmatpush1.msra.mxu0 0.0
  %925 = vmatprep.subr.mxu0 0.0
  %926 = vmatpush1.msra.mxu0 0.0
  %927 = vmatprep.subr.mxu0 0.0
  %928 = vmatpush1.msra.mxu0 0.0
  %929 = vmatprep.subr.mxu0 0.0
  %930 = vmatpush1.msra.mxu0 0.0
  %931 = vmatprep.subr.mxu0 0.0
  %932 = vmatpush1.msra.mxu0 0.0
  %933 = vmatprep.subr.mxu0 0.0
  %934 = vmatpush1.msra.mxu0 0.0
  %935 = vmatprep.subr.mxu0 0.0
  %936 = vmatpush1.msra.mxu0 0.0
  %937 = vmatprep.subr.mxu0 0.0
  %938 = vmatpush1.msra.mxu0 0.0
  %939 = vmatprep.subr.mxu0 0.0
  %940 = vmatpush1.msra.mxu0 0.0
  %941 = vmatprep.subr.mxu0 0.0
  %942 = vmatpush1.msra.mxu0 0.0
  %943 = vmatprep.subr.mxu0 0.0
  %944 = vmatpush1.msra.mxu0 0.0
  %945 = vmatprep.subr.mxu0 0.0
  %946 = vmatpush1.msra.mxu0 0.0
  %947 = vmatprep.subr.mxu0 0.0
  %948 = vmatpush1.msra.mxu0 0.0
  %949 = vmatprep.subr.mxu0 0.0
  %950 = vmatpush1.msra.mxu0 0.0
  %951 = vmatprep.subr.mxu0 0.0
  %952 = vmatpush1.msra.mxu0 0.0
  %953 = vmatprep.subr.mxu0 0.0
  %954 = vmatpush1.msra.mxu0 0.0
  %955 = vmatprep.subr.mxu0 0.0
  %956 = vmatpush1.msra.mxu0 0.0
  %957 = vmatprep.subr.mxu0 0.0
  %958 = vmatpush1.msra.mxu0 0.0
  %959 = vmatprep.subr.mxu0 0.0
  %960 = vmatpush1.msra.mxu0 0.0
  %961 = vmatprep.subr.mxu0 0.0
  %962 = vmatpush1.msra.mxu0 0.0
  %963 = vmatprep.subr.mxu0 0.0
  %964 = vmatpush1.msra.mxu0 0.0
  %965 = vmatprep.subr.mxu0 0.0
  %966 = vmatpush1.msra.mxu0 0.0
  %967 = vmatprep.subr.mxu0 0.0
  %968 = vmatpush1.msra.mxu0 0.0
  %969 = vmatprep.mubr.f32.mxu0 0.0
  %970 = vmatmul.mubr.f32.gmra.mrb[0].mxu0 %v820
  %v971 = vpop.f32.mrb[0].mxu0
  %v972 = vadd.f32 %v817, %v971
  %v973 = vpop.f32.mrb[0].mxu0
  %v974 = vadd.f32 %v817, %v973
  %975 = vdwg.mxu0
  %v978 = vcombine.high %v23, %v23
  %v979 = vcombine.high %v24, %v24
  %v982 = vadd.f32 %v901, %v23
  %v983 = vadd.f32 %v903, %v978
  %v984 = vadd.f32 %v972, %v24
  %v985 = vadd.f32 %v974, %v979
  %v990 = vcombine.low %v982, %v983
  %v991 = vcombine.low %v984, %v985
  %994 = vst [vmem:[%s6] sm:$0xff] %v990
  %995 = vst [vmem:[%s6 + $0x8] sm:$0xff] %v991
  // Predicated region
  $region26: #{residual_block.1} parent=0 // pred_check
    _
  $region27: #{residual_block.1} parent=0 // pred_check_branch
    %997 = sbr.rel (0) target = $region29
  $region28: #{residual_block.1} parent=0 // pred_region
    _
  $region29: #{residual_block.1} parent=0 // pred_fallthru
    _
  // Predicated region
  $region30: #{residual_block.1} parent=0 // pred_check
    _
  $region31: #{residual_block.1} parent=0 // pred_check_branch
    %999 = sbr.rel (0) target = $region33
  $region32: #{residual_block.1} parent=0 // pred_region
    _
  $region33: #{residual_block.1} parent=0 // pred_fallthru
    _

</llo_original>
